<compile_context>
chip_gen: v5e
topology: v5e:2x2
jax: 0.10.0
libtpu: 0.0.40
codegen_flags: <defaults>
</compile_context>

<pallas_src>
from functools import partial

import jax
import jax.numpy as jnp
from jax.experimental import pallas as pl
from jax.experimental.pallas import tpu as pltpu


def _round_up(n, m):
    return ((n + m - 1) // m) * m


def _ffn_kernel(x_ref, w1_ref, b1_ref, w2_ref, b2_ref, o_ref):
    # x_ref: (tm, Hf) activation tile; w*_ref: (Hf, Hf) pre-transposed (in, out)
    # weights in compute dtype; b*_ref: (1, Hf) f32 biases.
    x = x_ref[...]
    # conv1 (k=1): x @ W1^T  (W1^T pre-transposed host-side, native MXU dtype)
    h = jnp.dot(x.astype(w1_ref.dtype), w1_ref[...],
                preferred_element_type=jnp.float32)
    h = jnp.maximum(h + b1_ref[...], 0.0)                       # bias + ReLU (f32)
    # conv2 (k=1)
    y = jnp.dot(h.astype(w2_ref.dtype), w2_ref[...],
                preferred_element_type=jnp.float32)
    y = y + b2_ref[...] + x.astype(jnp.float32)                 # bias + residual (f32)
    o_ref[...] = y.astype(o_ref.dtype)


@partial(jax.jit, static_argnames=("tm", "compute_dtype", "single_buffer_weights"))
def pointwise_feedforward(x, w1, b1, w2, b2, *, tm=1024, compute_dtype=None,
                          single_buffer_weights=True):
    """x: (B, L, H).  w1, w2: (H, H) Conv1d(k=1) weights (out, in).  b1, b2: (H,).

    compute_dtype: matmul-operand dtype (e.g. jnp.bfloat16 for the bf16-native
    MXU).  Accumulation, bias and residual stay in f32; output keeps x.dtype.
    """
    B, L, H = x.shape
    M = B * L
    compute_dtype = jnp.dtype(x.dtype if compute_dtype is None else compute_dtype)

    # ---- lane layout: fold G tokens per row instead of padding H up to 128 ----
    if H % 128 == 0:
        G, Hf = 1, H
    elif 128 % H == 0:
        G, Hf = 128 // H, 128
    else:
        # TODO(synk): fold to lcm(H, 128) instead of zero-padding the lane dim.
        G, Hf = 1, _round_up(H, 128)

    x2 = x.reshape(M, H)
    Mp = M
    if M % G != 0:
        # TODO(synk): handle the ragged token tail in-kernel to avoid this copy.
        Mp = _round_up(M, G)
        x2 = jnp.pad(x2, ((0, Mp - M), (0, 0)))
    Mg = Mp // G
    x2 = x2.reshape(Mg, G * H)          # pure reshape (no copy) in the common case
    if Hf != G * H:                     # lane-pad fallback only
        x2 = jnp.pad(x2, ((0, 0), (0, Hf - G * H)))

    # ---- host-side weight prep: transpose once, block-diag fold, cast once ----
    def fold_w(w):
        wt = w.T                                              # (in, out)
        if G > 1:
            wt = jnp.kron(jnp.eye(G, dtype=wt.dtype), wt)     # block-diagonal
        if Hf != wt.shape[0]:
            p = Hf - wt.shape[0]
            wt = jnp.pad(wt, ((0, p), (0, p)))
        return wt.astype(compute_dtype)

    def fold_b(b):
        bb = jnp.tile(b, G) if G > 1 else b
        if Hf != bb.shape[0]:
            bb = jnp.pad(bb, (0, Hf - bb.shape[0]))
        return bb.astype(jnp.float32).reshape(1, Hf)

    w1t, b1p, w2t, b2p = fold_w(w1), fold_b(b1), fold_w(w2), fold_b(b2)

    # ---- row tiling: big tiles, >= 2 grid steps when possible (v7x 2 TCs) ----
    tm = max(128, _round_up(tm, 128))                 # MXU-aligned row tile
    tm_eff = min(tm, _round_up(pl.cdiv(Mg, 2), 8))
    if tm_eff >= Mg:
        tm_eff = Mg                                   # single full-extent block
    grid_m = pl.cdiv(Mg, tm_eff)

    # ---- VMEM budget: true per-buffer sum + 25% headroom, no double counting ----
    act_bytes = jnp.dtype(x.dtype).itemsize
    w_bytes = compute_dtype.itemsize
    n_wbuf = 1 if single_buffer_weights else 2
    vmem_need = (2 * tm_eff * Hf * act_bytes          # x tiles (double-buffered)
                 + 2 * tm_eff * Hf * act_bytes        # out tiles (double-buffered)
                 + n_wbuf * 2 * Hf * Hf * w_bytes     # W1^T + W2^T (resident)
                 + n_wbuf * 2 * Hf * 4)               # biases (f32)
    vmem_limit = min(max(int(vmem_need * 1.25), 16 * 1024 * 1024), 100 * 1024 * 1024)
    # TODO(synk): if vmem_need exceeds ~48 MiB (v7x has 64 MiB VMEM), add an
    # N-tiling grid axis over the weight output dim instead of relying on caps.

    weight_kwargs = {}
    if single_buffer_weights:
        # Constant-index blocks never change: single-buffer them to halve
        # resident-weight VMEM at zero perf cost.
        weight_kwargs = dict(pipeline_mode=pl.Buffered(1))

    in_specs = [
        pl.BlockSpec((tm_eff, Hf), lambda i: (i, 0)),                 # x rows
        pl.BlockSpec((Hf, Hf), lambda i: (0, 0), **weight_kwargs),    # W1^T
        pl.BlockSpec((1, Hf), lambda i: (0, 0), **weight_kwargs),     # b1
        pl.BlockSpec((Hf, Hf), lambda i: (0, 0), **weight_kwargs),    # W2^T
        pl.BlockSpec((1, Hf), lambda i: (0, 0), **weight_kwargs),     # b2
    ]

    cost = pl.CostEstimate(
        flops=4 * Mg * Hf * Hf,
        transcendentals=0,
        bytes_accessed=2 * Mg * Hf * act_bytes + 2 * Hf * Hf * w_bytes + 2 * Hf * 4,
    )

    out = pl.pallas_call(
        _ffn_kernel,
        out_shape=jax.ShapeDtypeStruct((Mg, Hf), x.dtype),
        grid_spec=pltpu.PrefetchScalarGridSpec(
            num_scalar_prefetch=0,
            grid=(grid_m,),
            in_specs=in_specs,
            out_specs=pl.BlockSpec((tm_eff, Hf), lambda i: (i, 0)),
        ),
        compiler_params=pltpu.CompilerParams(
            dimension_semantics=("parallel",),
            vmem_limit_bytes=vmem_limit,
        ),
        cost_estimate=cost,
    )(x2, w1t, b1p, w2t, b2p)

    if Hf != G * H:                       # lane-pad fallback only
        out = out[:, :G * H]
    out = out.reshape(Mp, H)
    if Mp != M:                           # padded ragged token tail only
        out = out[:M]
    return out.reshape(B, L, H)


def _reference(x, w1, b1, w2, b2):
    h = jnp.maximum(jnp.einsum("blh,oh->blo", x, w1) + b1, 0.0)
    y = jnp.einsum("blh,oh->blo", h, w2) + b2
    return y + x


if __name__ == "__main__":
    B, L, H = 2, 8, 32          # batch=2, seq_len=8, hidden_units=32
    key = jax.random.PRNGKey(0)
    kx, k1, k2, k3, k4 = jax.random.split(key, 5)

    x = jax.random.normal(kx, (B, L, H), dtype=jnp.float32)

    # Conv1d(k=1)-style params: weight (out=H, in=H), bias (H,)
    bound = 1.0 / (H ** 0.5)
    w1 = jax.random.uniform(k1, (H, H), jnp.float32, -bound, bound)
    b1 = jax.random.uniform(k2, (H,), jnp.float32, -bound, bound)
    w2 = jax.random.uniform(k3, (H, H), jnp.float32, -bound, bound)
    b2 = jax.random.uniform(k4, (H,), jnp.float32, -bound, bound)

    ref = _reference(x, w1, b1, w2, b2)

    def _run(single_buffer_weights):
        # f32 matmul operands: tight match vs the f32 reference.
        o32 = jax.block_until_ready(pointwise_feedforward(
            x, w1, b1, w2, b2, single_buffer_weights=single_buffer_weights))
        assert o32.shape == (B, L, H)
        assert jnp.allclose(o32, ref, atol=1e-4, rtol=1e-4), "f32 mismatch vs reference"
        # bf16 matmul operands (MXU-native path); accumulate/bias/residual in f32.
        o16 = jax.block_until_ready(pointwise_feedforward(
            x, w1, b1, w2, b2, compute_dtype=jnp.bfloat16,
            single_buffer_weights=single_buffer_weights))
        assert jnp.allclose(o16, ref, atol=3e-2, rtol=3e-2), "bf16 mismatch vs reference"
        return o32

    try:
        out = _run(single_buffer_weights=True)
    except Exception:
        # Fallback for JAX versions where pipeline_mode=pl.Buffered(1) is not
        # supported on the top-level pallas_call pipeline.
        out = _run(single_buffer_weights=False)

    print("KERNEL_OK")
</pallas_src>

<mosaic_0001>
module attributes {stable_mosaic.version = 11 : i64} {
  func.func @_ffn_kernel(%arg0: i32, %arg1: memref<4x128xf32, #tpu.memory_space<vmem>>, %arg2: memref<128x128xf32, #tpu.memory_space<vmem>>, %arg3: memref<1x128xf32, #tpu.memory_space<vmem>>, %arg4: memref<128x128xf32, #tpu.memory_space<vmem>>, %arg5: memref<1x128xf32, #tpu.memory_space<vmem>>, %arg6: memref<4x128xf32, #tpu.memory_space<vmem>>) attributes {dimension_semantics = [#tpu.dimension_semantics<parallel>], iteration_bounds = array<i64: 1>, scalar_prefetch = 0 : i64, scratch_operands = 0 : i64, tpu.core_type = #tpu.core_type<tc>, window_params = [{transform_indices = @transform_0, window_bounds = array<i64: 4, 128>}, {pipeline_mode = #tpu.pipeline_mode<synchronous>, transform_indices = @transform_1, window_bounds = array<i64: 128, 128>}, {pipeline_mode = #tpu.pipeline_mode<synchronous>, transform_indices = @transform_2, window_bounds = array<i64: 1, 128>}, {pipeline_mode = #tpu.pipeline_mode<synchronous>, transform_indices = @transform_3, window_bounds = array<i64: 128, 128>}, {pipeline_mode = #tpu.pipeline_mode<synchronous>, transform_indices = @transform_4, window_bounds = array<i64: 1, 128>}, {transform_indices = @transform_5, window_bounds = array<i64: 4, 128>}]} {
    %c0 = arith.constant 0 : index
    %c0_0 = arith.constant 0 : index
    %0 = vector.load %arg1[%c0, %c0_0] : memref<4x128xf32, #tpu.memory_space<vmem>>, vector<4x128xf32>
    %c0_1 = arith.constant 0 : index
    %c0_2 = arith.constant 0 : index
    %1 = vector.load %arg2[%c0_1, %c0_2] : memref<128x128xf32, #tpu.memory_space<vmem>>, vector<128x128xf32>
    %cst = arith.constant dense<0.000000e+00> : vector<4x128xf32>
    %2 = tpu.matmul %0, %1, %cst {dimension_numbers = #tpu.dot_dimension_numbers<[1], [0], [0], [1], [0, 0, 1, 1], [], []>} : vector<4x128xf32>, vector<128x128xf32>, vector<4x128xf32> -> vector<4x128xf32>
    %c0_3 = arith.constant 0 : index
    %c0_4 = arith.constant 0 : index
    %3 = vector.load %arg3[%c0_3, %c0_4] : memref<1x128xf32, #tpu.memory_space<vmem>>, vector<1x128xf32>
    %4 = vector.broadcast %3 : vector<1x128xf32> to vector<4x128xf32>
    %5 = arith.addf %2, %4 : vector<4x128xf32>
    %cst_5 = arith.constant 0.000000e+00 : f32
    %6 = vector.broadcast %cst_5 : f32 to vector<4x128xf32>
    %7 = arith.maximumf %5, %6 : vector<4x128xf32>
    %c0_6 = arith.constant 0 : index
    %c0_7 = arith.constant 0 : index
    %8 = vector.load %arg4[%c0_6, %c0_7] : memref<128x128xf32, #tpu.memory_space<vmem>>, vector<128x128xf32>
    %cst_8 = arith.constant dense<0.000000e+00> : vector<4x128xf32>
    %9 = tpu.matmul %7, %8, %cst_8 {dimension_numbers = #tpu.dot_dimension_numbers<[1], [0], [0], [1], [0, 0, 1, 1], [], []>} : vector<4x128xf32>, vector<128x128xf32>, vector<4x128xf32> -> vector<4x128xf32>
    %c0_9 = arith.constant 0 : index
    %c0_10 = arith.constant 0 : index
    %10 = vector.load %arg5[%c0_9, %c0_10] : memref<1x128xf32, #tpu.memory_space<vmem>>, vector<1x128xf32>
    %11 = vector.broadcast %10 : vector<1x128xf32> to vector<4x128xf32>
    %12 = arith.addf %9, %11 : vector<4x128xf32>
    %13 = arith.addf %12, %0 : vector<4x128xf32>
    %c0_11 = arith.constant 0 : index
    %c0_12 = arith.constant 0 : index
    %14 = vector.load %arg6[%c0_11, %c0_12] : memref<4x128xf32, #tpu.memory_space<vmem>>, vector<4x128xf32>
    tpu.vector_store %arg6[%c0_11, %c0_12], %13 {strides = array<i32>} : memref<4x128xf32, #tpu.memory_space<vmem>>, vector<4x128xf32>,
    return
  }
  func.func @transform_0(%arg0: i32) -> (i32, i32) {
    %c0_i32 = arith.constant 0 : i32
    %c0_i32_0 = arith.constant 0 : i32
    return %arg0, %c0_i32 : i32, i32
  }
  func.func @transform_1(%arg0: i32) -> (i32, i32) {
    %c0_i32 = arith.constant 0 : i32
    %c0_i32_0 = arith.constant 0 : i32
    %c0_i32_1 = arith.constant 0 : i32
    return %c0_i32, %c0_i32_0 : i32, i32
  }
  func.func @transform_2(%arg0: i32) -> (i32, i32) {
    %c0_i32 = arith.constant 0 : i32
    %c0_i32_0 = arith.constant 0 : i32
    %c0_i32_1 = arith.constant 0 : i32
    return %c0_i32, %c0_i32_0 : i32, i32
  }
  func.func @transform_3(%arg0: i32) -> (i32, i32) {
    %c0_i32 = arith.constant 0 : i32
    %c0_i32_0 = arith.constant 0 : i32
    %c0_i32_1 = arith.constant 0 : i32
    return %c0_i32, %c0_i32_0 : i32, i32
  }
  func.func @transform_4(%arg0: i32) -> (i32, i32) {
    %c0_i32 = arith.constant 0 : i32
    %c0_i32_0 = arith.constant 0 : i32
    %c0_i32_1 = arith.constant 0 : i32
    return %c0_i32, %c0_i32_0 : i32, i32
  }
  func.func @transform_5(%arg0: i32) -> (i32, i32) {
    %c0_i32 = arith.constant 0 : i32
    %c0_i32_0 = arith.constant 0 : i32
    return %arg0, %c0_i32 : i32, i32
  }
}

module attributes {stable_mosaic.version = 11 : i64} {
  func.func @_ffn_kernel(%arg0: i32, %arg1: memref<4x128xf32, #tpu.memory_space<vmem>>, %arg2: memref<128x128xf32, #tpu.memory_space<vmem>>, %arg3: memref<1x128xf32, #tpu.memory_space<vmem>>, %arg4: memref<128x128xf32, #tpu.memory_space<vmem>>, %arg5: memref<1x128xf32, #tpu.memory_space<vmem>>, %arg6: memref<4x128xf32, #tpu.memory_space<vmem>>) attributes {dimension_semantics = [#tpu.dimension_semantics<parallel>], iteration_bounds = array<i64: 1>, scalar_prefetch = 0 : i64, scratch_operands = 0 : i64, tpu.core_type = #tpu.core_type<tc>, window_params = [{transform_indices = @transform_0, window_bounds = array<i64: 4, 128>}, {pipeline_mode = #tpu.pipeline_mode<synchronous>, transform_indices = @transform_1, window_bounds = array<i64: 128, 128>}, {pipeline_mode = #tpu.pipeline_mode<synchronous>, transform_indices = @transform_2, window_bounds = array<i64: 1, 128>}, {pipeline_mode = #tpu.pipeline_mode<synchronous>, transform_indices = @transform_3, window_bounds = array<i64: 128, 128>}, {pipeline_mode = #tpu.pipeline_mode<synchronous>, transform_indices = @transform_4, window_bounds = array<i64: 1, 128>}, {transform_indices = @transform_5, window_bounds = array<i64: 4, 128>}]} {
    %c0 = arith.constant 0 : index
    %c0_0 = arith.constant 0 : index
    %0 = vector.load %arg1[%c0, %c0_0] : memref<4x128xf32, #tpu.memory_space<vmem>>, vector<4x128xf32>
    %c0_1 = arith.constant 0 : index
    %c0_2 = arith.constant 0 : index
    %1 = vector.load %arg2[%c0_1, %c0_2] : memref<128x128xf32, #tpu.memory_space<vmem>>, vector<128x128xf32>
    %cst = arith.constant dense<0.000000e+00> : vector<4x128xf32>
    %2 = tpu.matmul %0, %1, %cst {dimension_numbers = #tpu.dot_dimension_numbers<[1], [0], [0], [1], [0, 0, 1, 1], [], []>} : vector<4x128xf32>, vector<128x128xf32>, vector<4x128xf32> -> vector<4x128xf32>
    %c0_3 = arith.constant 0 : index
    %c0_4 = arith.constant 0 : index
    %3 = vector.load %arg3[%c0_3, %c0_4] : memref<1x128xf32, #tpu.memory_space<vmem>>, vector<1x128xf32>
    %4 = vector.broadcast %3 : vector<1x128xf32> to vector<4x128xf32>
    %5 = arith.addf %2, %4 : vector<4x128xf32>
    %cst_5 = arith.constant 0.000000e+00 : f32
    %6 = vector.broadcast %cst_5 : f32 to vector<4x128xf32>
    %7 = arith.maximumf %5, %6 : vector<4x128xf32>
    %c0_6 = arith.constant 0 : index
    %c0_7 = arith.constant 0 : index
    %8 = vector.load %arg4[%c0_6, %c0_7] : memref<128x128xf32, #tpu.memory_space<vmem>>, vector<128x128xf32>
    %cst_8 = arith.constant dense<0.000000e+00> : vector<4x128xf32>
    %9 = tpu.matmul %7, %8, %cst_8 {dimension_numbers = #tpu.dot_dimension_numbers<[1], [0], [0], [1], [0, 0, 1, 1], [], []>} : vector<4x128xf32>, vector<128x128xf32>, vector<4x128xf32> -> vector<4x128xf32>
    %c0_9 = arith.constant 0 : index
    %c0_10 = arith.constant 0 : index
    %10 = vector.load %arg5[%c0_9, %c0_10] : memref<1x128xf32, #tpu.memory_space<vmem>>, vector<1x128xf32>
    %11 = vector.broadcast %10 : vector<1x128xf32> to vector<4x128xf32>
    %12 = arith.addf %9, %11 : vector<4x128xf32>
    %13 = arith.addf %12, %0 : vector<4x128xf32>
    %c0_11 = arith.constant 0 : index
    %c0_12 = arith.constant 0 : index
    %14 = vector.load %arg6[%c0_11, %c0_12] : memref<4x128xf32, #tpu.memory_space<vmem>>, vector<4x128xf32>
    tpu.vector_store %arg6[%c0_11, %c0_12], %13 {strides = array<i32>} : memref<4x128xf32, #tpu.memory_space<vmem>>, vector<4x128xf32>,
    return
  }
  func.func @transform_0(%arg0: i32) -> (i32, i32) {
    %c0_i32 = arith.constant 0 : i32
    %c0_i32_0 = arith.constant 0 : i32
    return %arg0, %c0_i32 : i32, i32
  }
  func.func @transform_1(%arg0: i32) -> (i32, i32) {
    %c0_i32 = arith.constant 0 : i32
    %c0_i32_0 = arith.constant 0 : i32
    %c0_i32_1 = arith.constant 0 : i32
    return %c0_i32, %c0_i32_0 : i32, i32
  }
  func.func @transform_2(%arg0: i32) -> (i32, i32) {
    %c0_i32 = arith.constant 0 : i32
    %c0_i32_0 = arith.constant 0 : i32
    %c0_i32_1 = arith.constant 0 : i32
    return %c0_i32, %c0_i32_0 : i32, i32
  }
  func.func @transform_3(%arg0: i32) -> (i32, i32) {
    %c0_i32 = arith.constant 0 : i32
    %c0_i32_0 = arith.constant 0 : i32
    %c0_i32_1 = arith.constant 0 : i32
    return %c0_i32, %c0_i32_0 : i32, i32
  }
  func.func @transform_4(%arg0: i32) -> (i32, i32) {
    %c0_i32 = arith.constant 0 : i32
    %c0_i32_0 = arith.constant 0 : i32
    %c0_i32_1 = arith.constant 0 : i32
    return %c0_i32, %c0_i32_0 : i32, i32
  }
  func.func @transform_5(%arg0: i32) -> (i32, i32) {
    %c0_i32 = arith.constant 0 : i32
    %c0_i32_0 = arith.constant 0 : i32
    return %arg0, %c0_i32 : i32, i32
  }
}

</mosaic_0001>

<llo_original>
// kernel: tile.13
$region0: #{tile.13}
  #allocation0 [shape = 's32[1]{0}', space=sflag, size = 0x4, scoped, tag = 'scoped memory for tile.13']
  %s0 = inlined_call_operand.vmem [shape: f32[32], index: 0, kind: input, shape index: {}]
  %s1 = inlined_call_operand.vmem [shape: f32[4,32], index: 1, kind: output, shape index: {}]
  // Predicated region
  $region2: #{tile.13} parent=0 // pred_check
    _
  $region3: #{tile.13} parent=0 // pred_check_branch
    %3 = sbr.rel (0) target = $region5
  $region4: #{tile.13} parent=0 // pred_region
    _
  $region5: #{tile.13} parent=0 // pred_fallthru
    _
  %v4 = vld [vmem:[%s0] ss:$0 sm:$0xff]
  %5 = vst [vmem:[%s1] sm:$0xf] %v4

// kernel: tile.14
$region0: #{tile.14}
  %s0 = inlined_call_operand.vmem [shape: f32[4,32], index: 0, kind: input, shape index: {}]
  %s1 = inlined_call_operand.vmem [shape: f32[1,128], index: 1, kind: output, shape index: {}]
  $region1: #{tile.14} parent=0
    #allocation0 [shape = 'u8[4096]{0}', space=vmem, size = 0x1000, scoped, tag = 'scoped mem for output reshape']
    #allocation1 [shape = 'u8[4096]{0}', space=vmem, size = 0x1000, scoped, tag = 'scoped mem for input reshape']
    %s3 = ssub.s32 16, 1
    %v4 = vld [vmem:[%s0] sm:%s3]
    %5 = vst [vmem:[#allocation1] sm:%s3] %v4
    %v6 = vld [vmem:[#allocation1] sm:$0x1]
    %vm7 = vcmask 261120
    %8 = vst.msk [vmem:[#allocation0] sm:$0x1] %vm7, %v6
    %s9 = scalar_lea.vmem [#allocation1], 3
    %v10 = vld [vmem:[%s9] sm:$0x1]
    %11 = vrot.lane.b32.xlu0 %v10, 96
    %v12 = vpop.permute.xlu0 %11
    %vm13 = vcmask 1048320
    %14 = vst.msk [vmem:[#allocation0] sm:$0x1] %vm13, %v12
    %s15 = scalar_lea.vmem [#allocation1], 2
    %v16 = vld [vmem:[%s15] sm:$0x1]
    %17 = vrot.lane.b32.xlu0 %v16, 64
    %v18 = vpop.permute.xlu0 %17
    %vm19 = vcmask 785920
    %20 = vst.msk [vmem:[#allocation0] sm:$0x1] %vm19, %v18
    %s21 = scalar_lea.vmem [#allocation1], 1
    %v22 = vld [vmem:[%s21] sm:$0x1]
    %23 = vrot.lane.b32.xlu0 %v22, 32
    %v24 = vpop.permute.xlu0 %23
    %vm25 = vcmask 523520
    %26 = vst.msk [vmem:[#allocation0] sm:$0x1] %vm25, %v24
    %s28 = ssub.s32 2, 1
    %v29 = vld [vmem:[#allocation0] sm:%s28]
    %s31 = ssub.s32 2, 1
    %32 = vst [vmem:[%s1] sm:%s31] %v29

// kernel: pointwise_feedforward.1
$region0: #{pointwise_feedforward.1}
  #allocation0 [shape = 'u32[]', space=smem, size = 0x4, offset = 0x4, fixed_abs, tag = 'smem constant byte address 0x4 - core index']
  #allocation1 [shape = 'u32[72,128]{1,0:T(1,128)}', space=vmem, size = 0x9000, scoped, tag = 'internal scratch']
  %s0 = inlined_call_operand.vmem [shape: f32[4,128], index: 0, kind: input, shape index: {}]
  %s1 = inlined_call_operand.vmem [shape: f32[128,128], index: 1, kind: input, shape index: {}]
  %s2 = inlined_call_operand.vmem [shape: f32[1,128], index: 2, kind: input, shape index: {}]
  %s3 = inlined_call_operand.vmem [shape: f32[128,128], index: 3, kind: input, shape index: {}]
  %s4 = inlined_call_operand.vmem [shape: f32[1,128], index: 4, kind: input, shape index: {}]
  %s5 = inlined_call_operand.vmem [shape: f32[4,128], index: 5, kind: output, shape index: {}]
  %s6 = sld [smem:[#allocation0]]
  $region30: #{pointwise_feedforward.1} parent=0
    _
  %s8 = ssub.s32 1, %s6
  %s9 = scalar_select 0, %s8, %s6
  // Predicated region
  $region2: #{pointwise_feedforward.1} parent=0 // pred_check
    _
  $region3: #{pointwise_feedforward.1} parent=0 // pred_check_branch
    %11 = sbr.rel (0) target = $region5
  $region4: #{pointwise_feedforward.1} parent=0 // pred_region
    _
  $region5: #{pointwise_feedforward.1} parent=0 // pred_fallthru
    _
  // Predicated region
  $region6: #{pointwise_feedforward.1} parent=0 // pred_check
    _
  $region7: #{pointwise_feedforward.1} parent=0 // pred_check_branch
    %13 = sbr.rel (0) target = $region9
  $region8: #{pointwise_feedforward.1} parent=0 // pred_region
    _
  $region9: #{pointwise_feedforward.1} parent=0 // pred_fallthru
    _
  // Predicated region
  $region10: #{pointwise_feedforward.1} parent=0 // pred_check
    _
  $region11: #{pointwise_feedforward.1} parent=0 // pred_check_branch
    %15 = sbr.rel (0) target = $region13
  $region12: #{pointwise_feedforward.1} parent=0 // pred_region
    _
  $region13: #{pointwise_feedforward.1} parent=0 // pred_fallthru
    _
  // Predicated region
  $region14: #{pointwise_feedforward.1} parent=0 // pred_check
    _
  $region15: #{pointwise_feedforward.1} parent=0 // pred_check_branch
    %17 = sbr.rel (0) target = $region17
  $region16: #{pointwise_feedforward.1} parent=0 // pred_region
    _
  $region17: #{pointwise_feedforward.1} parent=0 // pred_fallthru
    _
  // Predicated region
  $region18: #{pointwise_feedforward.1} parent=0 // pred_check
    _
  $region19: #{pointwise_feedforward.1} parent=0 // pred_check_branch
    %19 = sbr.rel (0) target = $region21
  $region20: #{pointwise_feedforward.1} parent=0 // pred_region
    _
  $region21: #{pointwise_feedforward.1} parent=0 // pred_fallthru
    _
  %v20 = vld [vmem:[%s0] sm:$0xf]
  %v21 = vld [vmem:[%s1] sm:$0xff]
  %v22 = vld [vmem:[%s1 + $0x8] sm:$0xff]
  %v23 = vld [vmem:[%s1 + $0x10] sm:$0xff]
  %v24 = vld [vmem:[%s1 + $0x18] sm:$0xff]
  %v25 = vld [vmem:[%s1 + $0x20] sm:$0xff]
  %v26 = vld [vmem:[%s1 + $0x28] sm:$0xff]
  %v27 = vld [vmem:[%s1 + $0x30] sm:$0xff]
  %v28 = vld [vmem:[%s1 + $0x38] sm:$0xff]
  %v29 = vld [vmem:[%s1 + $0x40] sm:$0xff]
  %v30 = vld [vmem:[%s1 + $0x48] sm:$0xff]
  %v31 = vld [vmem:[%s1 + $0x50] sm:$0xff]
  %v32 = vld [vmem:[%s1 + $0x58] sm:$0xff]
  %v33 = vld [vmem:[%s1 + $0x60] sm:$0xff]
  %v34 = vld [vmem:[%s1 + $0x68] sm:$0xff]
  %v35 = vld [vmem:[%s1 + $0x70] sm:$0xff]
  %v36 = vld [vmem:[%s1 + $0x78] sm:$0xff]
  %v37 = vld [vmem:[%s2] sm:$0x1]
  %v39 = vperm.slane %v37, 0
  %41 = vmatpush.msra.mxu0 %v36
  %42 = vmatpush.msra.mxu0 %v35
  %43 = vmatpush.msra.mxu0 %v34
  %44 = vmatpush.msra.mxu0 %v33
  %45 = vmatpush.msra.mxu0 %v32
  %46 = vmatpush.msra.mxu0 %v31
  %47 = vmatpush.msra.mxu0 %v30
  %48 = vmatpush.msra.mxu0 %v29
  %49 = vmatpush.msra.mxu0 %v28
  %50 = vmatpush.msra.mxu0 %v27
  %51 = vmatpush.msra.mxu0 %v26
  %52 = vmatpush.msra.mxu0 %v25
  %53 = vmatpush.msra.mxu0 %v24
  %54 = vmatpush.msra.mxu0 %v23
  %55 = vmatpush.msra.mxu0 %v22
  %56 = vmatpush.msra.mxu0 %v21
  %57 = vmatmul.f32.gmra.mxu0 %v20
  %v58 = vpop.f32.mrf.mxu0
  %v59 = vadd.f32 %v39, %v58
  %60 = vdwg.mxu0
  %v61 = vmax.f32 %v59, 0.0
  %v62 = vld [vmem:[%s3] sm:$0xff]
  %v63 = vld [vmem:[%s3 + $0x8] sm:$0xff]
  %v64 = vld [vmem:[%s3 + $0x10] sm:$0xff]
  %v65 = vld [vmem:[%s3 + $0x18] sm:$0xff]
  %v66 = vld [vmem:[%s3 + $0x20] sm:$0xff]
  %v67 = vld [vmem:[%s3 + $0x28] sm:$0xff]
  %v68 = vld [vmem:[%s3 + $0x30] sm:$0xff]
  %v69 = vld [vmem:[%s3 + $0x38] sm:$0xff]
  %v70 = vld [vmem:[%s3 + $0x40] sm:$0xff]
  %v71 = vld [vmem:[%s3 + $0x48] sm:$0xff]
  %v72 = vld [vmem:[%s3 + $0x50] sm:$0xff]
  %v73 = vld [vmem:[%s3 + $0x58] sm:$0xff]
  %v74 = vld [vmem:[%s3 + $0x60] sm:$0xff]
  %v75 = vld [vmem:[%s3 + $0x68] sm:$0xff]
  %v76 = vld [vmem:[%s3 + $0x70] sm:$0xff]
  %v77 = vld [vmem:[%s3 + $0x78] sm:$0xff]
  %v78 = vld [vmem:[%s4] sm:$0x1]
  %v80 = vperm.slane %v78, 0
  %82 = vmatpush.msra.mxu0 %v77
  %83 = vmatpush.msra.mxu0 %v76
  %84 = vmatpush.msra.mxu0 %v75
  %85 = vmatpush.msra.mxu0 %v74
  %86 = vmatpush.msra.mxu0 %v73
  %87 = vmatpush.msra.mxu0 %v72
  %88 = vmatpush.msra.mxu0 %v71
  %89 = vmatpush.msra.mxu0 %v70
  %90 = vmatpush.msra.mxu0 %v69
  %91 = vmatpush.msra.mxu0 %v68
  %92 = vmatpush.msra.mxu0 %v67
  %93 = vmatpush.msra.mxu0 %v66
  %94 = vmatpush.msra.mxu0 %v65
  %95 = vmatpush.msra.mxu0 %v64
  %96 = vmatpush.msra.mxu0 %v63
  %97 = vmatpush.msra.mxu0 %v62
  %98 = vmatmul.f32.gmra.mxu0 %v61
  %v99 = vpop.f32.mrf.mxu0
  %v100 = vadd.f32 %v80, %v99
  %101 = vdwg.mxu0
  %v102 = vadd.f32 %v100, %v20
  %103 = vst [vmem:[%s5] sm:$0xf] %v102
  // Predicated region
  $region22: #{pointwise_feedforward.1} parent=0 // pred_check
    _
  $region23: #{pointwise_feedforward.1} parent=0 // pred_check_branch
    %105 = sbr.rel (0) target = $region25
  $region24: #{pointwise_feedforward.1} parent=0 // pred_region
    _
  $region25: #{pointwise_feedforward.1} parent=0 // pred_fallthru
    _
  // Predicated region
  $region26: #{pointwise_feedforward.1} parent=0 // pred_check
    _
  $region27: #{pointwise_feedforward.1} parent=0 // pred_check_branch
    %107 = sbr.rel (0) target = $region29
  $region28: #{pointwise_feedforward.1} parent=0 // pred_region
    _
  $region29: #{pointwise_feedforward.1} parent=0 // pred_fallthru
    _

// kernel: tile.13
$region0: #{tile.13}
  #allocation0 [shape = 's32[1]{0}', space=sflag, size = 0x4, scoped, tag = 'scoped memory for tile.13']
  %s0 = inlined_call_operand.vmem [shape: f32[32], index: 0, kind: input, shape index: {}]
  %s1 = inlined_call_operand.vmem [shape: f32[4,32], index: 1, kind: output, shape index: {}]
  // Predicated region
  $region2: #{tile.13} parent=0 // pred_check
    _
  $region3: #{tile.13} parent=0 // pred_check_branch
    %3 = sbr.rel (0) target = $region5
  $region4: #{tile.13} parent=0 // pred_region
    _
  $region5: #{tile.13} parent=0 // pred_fallthru
    _
  %v4 = vld [vmem:[%s0] ss:$0 sm:$0xff]
  %5 = vst [vmem:[%s1] sm:$0xf] %v4

// kernel: tile.14
$region0: #{tile.14}
  %s0 = inlined_call_operand.vmem [shape: f32[4,32], index: 0, kind: input, shape index: {}]
  %s1 = inlined_call_operand.vmem [shape: f32[1,128], index: 1, kind: output, shape index: {}]
  $region1: #{tile.14} parent=0
    #allocation0 [shape = 'u8[4096]{0}', space=vmem, size = 0x1000, scoped, tag = 'scoped mem for output reshape']
    #allocation1 [shape = 'u8[4096]{0}', space=vmem, size = 0x1000, scoped, tag = 'scoped mem for input reshape']
    %s3 = ssub.s32 16, 1
    %v4 = vld [vmem:[%s0] sm:%s3]
    %5 = vst [vmem:[#allocation1] sm:%s3] %v4
    %v6 = vld [vmem:[#allocation1] sm:$0x1]
    %vm7 = vcmask 261120
    %8 = vst.msk [vmem:[#allocation0] sm:$0x1] %vm7, %v6
    %s9 = scalar_lea.vmem [#allocation1], 3
    %v10 = vld [vmem:[%s9] sm:$0x1]
    %11 = vrot.lane.b32.xlu0 %v10, 96
    %v12 = vpop.permute.xlu0 %11
    %vm13 = vcmask 1048320
    %14 = vst.msk [vmem:[#allocation0] sm:$0x1] %vm13, %v12
    %s15 = scalar_lea.vmem [#allocation1], 2
    %v16 = vld [vmem:[%s15] sm:$0x1]
    %17 = vrot.lane.b32.xlu0 %v16, 64
    %v18 = vpop.permute.xlu0 %17
    %vm19 = vcmask 785920
    %20 = vst.msk [vmem:[#allocation0] sm:$0x1] %vm19, %v18
    %s21 = scalar_lea.vmem [#allocation1], 1
    %v22 = vld [vmem:[%s21] sm:$0x1]
    %23 = vrot.lane.b32.xlu0 %v22, 32
    %v24 = vpop.permute.xlu0 %23
    %vm25 = vcmask 523520
    %26 = vst.msk [vmem:[#allocation0] sm:$0x1] %vm25, %v24
    %s28 = ssub.s32 2, 1
    %v29 = vld [vmem:[#allocation0] sm:%s28]
    %s31 = ssub.s32 2, 1
    %32 = vst [vmem:[%s1] sm:%s31] %v29

// kernel: pointwise_feedforward.1
$region0: #{pointwise_feedforward.1}
  #allocation0 [shape = 'u32[]', space=smem, size = 0x4, offset = 0x4, fixed_abs, tag = 'smem constant byte address 0x4 - core index']
  #allocation1 [shape = 'u32[72,128]{1,0:T(1,128)}', space=vmem, size = 0x9000, scoped, tag = 'internal scratch']
  %s0 = inlined_call_operand.vmem [shape: f32[4,128], index: 0, kind: input, shape index: {}]
  %s1 = inlined_call_operand.vmem [shape: f32[128,128], index: 1, kind: input, shape index: {}]
  %s2 = inlined_call_operand.vmem [shape: f32[1,128], index: 2, kind: input, shape index: {}]
  %s3 = inlined_call_operand.vmem [shape: f32[128,128], index: 3, kind: input, shape index: {}]
  %s4 = inlined_call_operand.vmem [shape: f32[1,128], index: 4, kind: input, shape index: {}]
  %s5 = inlined_call_operand.vmem [shape: f32[4,128], index: 5, kind: output, shape index: {}]
  %s6 = sld [smem:[#allocation0]]
  $region30: #{pointwise_feedforward.1} parent=0
    _
  %s8 = ssub.s32 1, %s6
  %s9 = scalar_select 0, %s8, %s6
  // Predicated region
  $region2: #{pointwise_feedforward.1} parent=0 // pred_check
    _
  $region3: #{pointwise_feedforward.1} parent=0 // pred_check_branch
    %11 = sbr.rel (0) target = $region5
  $region4: #{pointwise_feedforward.1} parent=0 // pred_region
    _
  $region5: #{pointwise_feedforward.1} parent=0 // pred_fallthru
    _
  // Predicated region
  $region6: #{pointwise_feedforward.1} parent=0 // pred_check
    _
  $region7: #{pointwise_feedforward.1} parent=0 // pred_check_branch
    %13 = sbr.rel (0) target = $region9
  $region8: #{pointwise_feedforward.1} parent=0 // pred_region
    _
  $region9: #{pointwise_feedforward.1} parent=0 // pred_fallthru
    _
  // Predicated region
  $region10: #{pointwise_feedforward.1} parent=0 // pred_check
    _
  $region11: #{pointwise_feedforward.1} parent=0 // pred_check_branch
    %15 = sbr.rel (0) target = $region13
  $region12: #{pointwise_feedforward.1} parent=0 // pred_region
    _
  $region13: #{pointwise_feedforward.1} parent=0 // pred_fallthru
    _
  // Predicated region
  $region14: #{pointwise_feedforward.1} parent=0 // pred_check
    _
  $region15: #{pointwise_feedforward.1} parent=0 // pred_check_branch
    %17 = sbr.rel (0) target = $region17
  $region16: #{pointwise_feedforward.1} parent=0 // pred_region
    _
  $region17: #{pointwise_feedforward.1} parent=0 // pred_fallthru
    _
  // Predicated region
  $region18: #{pointwise_feedforward.1} parent=0 // pred_check
    _
  $region19: #{pointwise_feedforward.1} parent=0 // pred_check_branch
    %19 = sbr.rel (0) target = $region21
  $region20: #{pointwise_feedforward.1} parent=0 // pred_region
    _
  $region21: #{pointwise_feedforward.1} parent=0 // pred_fallthru
    _
  %v20 = vld [vmem:[%s0] sm:$0xf]
  %v21 = vld [vmem:[%s1] sm:$0xff]
  %v22 = vld [vmem:[%s1 + $0x8] sm:$0xff]
  %v23 = vld [vmem:[%s1 + $0x10] sm:$0xff]
  %v24 = vld [vmem:[%s1 + $0x18] sm:$0xff]
  %v25 = vld [vmem:[%s1 + $0x20] sm:$0xff]
  %v26 = vld [vmem:[%s1 + $0x28] sm:$0xff]
  %v27 = vld [vmem:[%s1 + $0x30] sm:$0xff]
  %v28 = vld [vmem:[%s1 + $0x38] sm:$0xff]
  %v29 = vld [vmem:[%s1 + $0x40] sm:$0xff]
  %v30 = vld [vmem:[%s1 + $0x48] sm:$0xff]
  %v31 = vld [vmem:[%s1 + $0x50] sm:$0xff]
  %v32 = vld [vmem:[%s1 + $0x58] sm:$0xff]
  %v33 = vld [vmem:[%s1 + $0x60] sm:$0xff]
  %v34 = vld [vmem:[%s1 + $0x68] sm:$0xff]
  %v35 = vld [vmem:[%s1 + $0x70] sm:$0xff]
  %v36 = vld [vmem:[%s1 + $0x78] sm:$0xff]
  %v37 = vld [vmem:[%s2] sm:$0x1]
  %v39 = vperm.slane %v37, 0
  %41 = vmatpush.msra.mxu0 %v36
  %42 = vmatpush.msra.mxu0 %v35
  %43 = vmatpush.msra.mxu0 %v34
  %44 = vmatpush.msra.mxu0 %v33
  %45 = vmatpush.msra.mxu0 %v32
  %46 = vmatpush.msra.mxu0 %v31
  %47 = vmatpush.msra.mxu0 %v30
  %48 = vmatpush.msra.mxu0 %v29
  %49 = vmatpush.msra.mxu0 %v28
  %50 = vmatpush.msra.mxu0 %v27
  %51 = vmatpush.msra.mxu0 %v26
  %52 = vmatpush.msra.mxu0 %v25
  %53 = vmatpush.msra.mxu0 %v24
  %54 = vmatpush.msra.mxu0 %v23
  %55 = vmatpush.msra.mxu0 %v22
  %56 = vmatpush.msra.mxu0 %v21
  %57 = vmatmul.f32.gmra.mxu0 %v20
  %v58 = vpop.f32.mrf.mxu0
  %v59 = vadd.f32 %v39, %v58
  %60 = vdwg.mxu0
  %v61 = vmax.f32 %v59, 0.0
  %v62 = vld [vmem:[%s3] sm:$0xff]
  %v63 = vld [vmem:[%s3 + $0x8] sm:$0xff]
  %v64 = vld [vmem:[%s3 + $0x10] sm:$0xff]
  %v65 = vld [vmem:[%s3 + $0x18] sm:$0xff]
  %v66 = vld [vmem:[%s3 + $0x20] sm:$0xff]
  %v67 = vld [vmem:[%s3 + $0x28] sm:$0xff]
  %v68 = vld [vmem:[%s3 + $0x30] sm:$0xff]
  %v69 = vld [vmem:[%s3 + $0x38] sm:$0xff]
  %v70 = vld [vmem:[%s3 + $0x40] sm:$0xff]
  %v71 = vld [vmem:[%s3 + $0x48] sm:$0xff]
  %v72 = vld [vmem:[%s3 + $0x50] sm:$0xff]
  %v73 = vld [vmem:[%s3 + $0x58] sm:$0xff]
  %v74 = vld [vmem:[%s3 + $0x60] sm:$0xff]
  %v75 = vld [vmem:[%s3 + $0x68] sm:$0xff]
  %v76 = vld [vmem:[%s3 + $0x70] sm:$0xff]
  %v77 = vld [vmem:[%s3 + $0x78] sm:$0xff]
  %v78 = vld [vmem:[%s4] sm:$0x1]
  %v80 = vperm.slane %v78, 0
  %82 = vmatpush.msra.mxu0 %v77
  %83 = vmatpush.msra.mxu0 %v76
  %84 = vmatpush.msra.mxu0 %v75
  %85 = vmatpush.msra.mxu0 %v74
  %86 = vmatpush.msra.mxu0 %v73
  %87 = vmatpush.msra.mxu0 %v72
  %88 = vmatpush.msra.mxu0 %v71
  %89 = vmatpush.msra.mxu0 %v70
  %90 = vmatpush.msra.mxu0 %v69
  %91 = vmatpush.msra.mxu0 %v68
  %92 = vmatpush.msra.mxu0 %v67
  %93 = vmatpush.msra.mxu0 %v66
  %94 = vmatpush.msra.mxu0 %v65
  %95 = vmatpush.msra.mxu0 %v64
  %96 = vmatpush.msra.mxu0 %v63
  %97 = vmatpush.msra.mxu0 %v62
  %98 = vmatmul.f32.gmra.mxu0 %v61
  %v99 = vpop.f32.mrf.mxu0
  %v100 = vadd.f32 %v80, %v99
  %101 = vdwg.mxu0
  %v102 = vadd.f32 %v100, %v20
  %103 = vst [vmem:[%s5] sm:$0xf] %v102
  // Predicated region
  $region22: #{pointwise_feedforward.1} parent=0 // pred_check
    _
  $region23: #{pointwise_feedforward.1} parent=0 // pred_check_branch
    %105 = sbr.rel (0) target = $region25
  $region24: #{pointwise_feedforward.1} parent=0 // pred_region
    _
  $region25: #{pointwise_feedforward.1} parent=0 // pred_fallthru
    _
  // Predicated region
  $region26: #{pointwise_feedforward.1} parent=0 // pred_check
    _
  $region27: #{pointwise_feedforward.1} parent=0 // pred_check_branch
    %107 = sbr.rel (0) target = $region29
  $region28: #{pointwise_feedforward.1} parent=0 // pred_region
    _
  $region29: #{pointwise_feedforward.1} parent=0 // pred_fallthru
    _

</llo_original>
